<compile_context>
chip_gen: v7x
topology: tpu7x:2x2x1
jax: 0.10.0
libtpu: 0.0.40
codegen_flags: <defaults>
</compile_context>

<pallas_src>
import functools

import jax
import jax.numpy as jnp
from jax import lax
from jax.experimental import pallas as pl
from jax.experimental.pallas import tpu as pltpu

TEMPERATURE = 0.07
BASE_TEMPERATURE = 0.07
_NEG_BIG = -1e30          # large finite negative (avoids -inf -> inf-inf NaN)
_LANE = 128
_SUBLANE = 8


def _round_up(x, m):
    return ((x + m - 1) // m) * m


def _vmem_capacity_bytes():
    try:
        return int(pltpu.get_tpu_info().vmem_capacity_bytes)
    except Exception:
        return 64 * 1024 * 1024   # conservative: v7x per-TensorCore VMEM


# ----------------------------------------------------------------------------
# Resident-contrast-matrix kernel: grid = (row_tiles,).  The whole padded
# contrast matrix is one VMEM block -> single-pass LSE, no running scratch.
# ----------------------------------------------------------------------------
def _simclr_resident_kernel(rows_ref, g_ref, cols_ref, out_ref, *,
                            n_valid, n_views, inv_t, has_pad):
    i = pl.program_id(0)
    tile_m = rows_ref.shape[0]
    n_pad = cols_ref.shape[0]

    rows = rows_ref[...]                                   # [tile_m, D]
    rs = rows * inv_t                                      # scale anchors once
    # Similarity logits; contract D on both operands (no transpose copy).
    s = lax.dot_general(rs, cols_ref[...],
                        dimension_numbers=(((1,), (1,)), ((), ())),
                        preferred_element_type=jnp.float32)   # [tile_m, n_pad]

    # Row max includes the diagonal (as in the PyTorch reference).  Padded
    # columns are exactly 0 <= diag (= ||f||^2/T), so no mask is needed here.
    m = jnp.max(s, axis=1, keepdims=True)                  # [tile_m, 1]

    # Denominator: exp over valid, non-diagonal columns only.
    col_ids = lax.broadcasted_iota(jnp.int32, (1, n_pad), 1)
    row_gids = i * tile_m + lax.broadcasted_iota(jnp.int32, (tile_m, 1), 0)
    keep = col_ids != row_gids
    if has_pad:
        keep = jnp.logical_and(keep, col_ids < n_valid)
    denom = jnp.sum(jnp.where(keep, jnp.exp(s - m), 0.0),
                    axis=1, keepdims=True)

    # Positive-pair logit sum from the per-sample summed features g.
    rows32 = rows.astype(jnp.float32)
    g32 = g_ref[...].astype(jnp.float32)
    pos_with_self = jnp.sum(rows32 * g32, axis=1, keepdims=True) * inv_t
    self_sim = jnp.sum(rows32 * rows32, axis=1, keepdims=True) * inv_t
    pos = (pos_with_self - self_sim) * (1.0 / (n_views - 1))

    out_ref[...] = pos - m - jnp.log(denom)


# ----------------------------------------------------------------------------
# Tiled fallback: grid = (row_tiles, col_tiles), online log-sum-exp.  Interior
# (i != j) tiles carry no mask work at all; only the square diagonal tile pays
# the (static) identity-mask select.
# ----------------------------------------------------------------------------
def _simclr_tiled_kernel(rows_ref, g_ref, cols_ref, out_ref,
                         m_sc, l_sc, rs_sc, *,
                         n_valid, n_views, inv_t, has_pad):
    i = pl.program_id(0)
    j = pl.program_id(1)
    nj = pl.num_programs(1)
    tile = rows_ref.shape[0]

    @pl.when(j == 0)
    def _():
        m_sc[...] = jnp.full_like(m_sc, _NEG_BIG)
        l_sc[...] = jnp.zeros_like(l_sc)
        rs_sc[...] = rows_ref[...] * inv_t       # scale anchors once / row tile

    s = lax.dot_general(rs_sc[...], cols_ref[...],
                        dimension_numbers=(((1,), (1,)), ((), ())),
                        preferred_element_type=jnp.float32)    # [tile, tile]
    if has_pad:
        col_ids = j * tile + lax.broadcasted_iota(jnp.int32, (1, tile), 1)
        s = jnp.where(col_ids < n_valid, s, _NEG_BIG)

    m_prev = m_sc[...]
    m_new = jnp.maximum(m_prev, jnp.max(s, axis=1, keepdims=True))
    alpha = jnp.exp(m_prev - m_new)
    e = jnp.exp(s - m_new)

    @pl.when(i != j)
    def _():  # interior tile: mask-free accumulation
        l_sc[...] = l_sc[...] * alpha + jnp.sum(e, axis=1, keepdims=True)

    @pl.when(i == j)
    def _():  # diagonal tile: exclude the self-similarity (static pattern)
        lr = lax.broadcasted_iota(jnp.int32, (tile, tile), 0)
        lc = lax.broadcasted_iota(jnp.int32, (tile, tile), 1)
        e_nd = jnp.where(lr == lc, 0.0, e)
        l_sc[...] = l_sc[...] * alpha + jnp.sum(e_nd, axis=1, keepdims=True)

    m_sc[...] = m_new

    @pl.when(j == nj - 1)
    def _():
        rows32 = rows_ref[...].astype(jnp.float32)
        g32 = g_ref[...].astype(jnp.float32)
        pos_with_self = jnp.sum(rows32 * g32, axis=1, keepdims=True) * inv_t
        self_sim = jnp.sum(rows32 * rows32, axis=1, keepdims=True) * inv_t
        pos = (pos_with_self - self_sim) * (1.0 / (n_views - 1))
        out_ref[...] = pos - m_sc[...] - jnp.log(l_sc[...])


def simclr_loss(features, temperature=TEMPERATURE,
                base_temperature=BASE_TEMPERATURE, *,
                compute_dtype=jnp.bfloat16, tile_m=None, resident=None):
    """SimCLR loss (contrast_mode='all', labels=None, mask=None).

    compute_dtype: dtype fed to the MXU (accumulation always f32); bfloat16 by
        default, pass None to keep the input dtype.
    tile_m: anchor-row tile size (default 256, auto-capped / rounded).
    resident: force the resident-contrast-matrix path (True/False); None=auto.
    """
    if features.ndim < 3:
        raise ValueError('`features` needs to be [bsz, n_views, ...], '
                         'at least 3 dimensions are required')
    bsz, n_views = features.shape[0], features.shape[1]
    if n_views < 2:
        raise ValueError('n_views must be >= 2 for SimCLR loss')

    feats = features.reshape(bsz, n_views, -1)
    d = feats.shape[-1]
    n = bsz * n_views

    # Batch-major flatten (free reshape; no HBM transpose pass).  The per-anchor
    # SimCLR value only depends on *sets* of similarities, so the mean over all
    # anchors equals the PyTorch view-major (cat(unbind(...))) ordering exactly.
    contrast = feats.reshape(n, d)
    if compute_dtype is not None:
        contrast = contrast.astype(compute_dtype)

    # Per-row summed same-sample features (f32): row r of g is sum_v f[sample(r), v].
    feats32 = feats.astype(jnp.float32)
    g = jnp.broadcast_to(jnp.sum(feats32, axis=1, keepdims=True),
                         feats32.shape).reshape(n, d)

    # Tile / padding choices.
    if tile_m is None:
        tile_m = 256
    tile_m = _round_up(tile_m, _SUBLANE)
    # Keep >= 2 row tiles when the problem allows, so the "parallel" axis can
    # be split across v7x's two TensorCores.
    tile_m = max(_SUBLANE, min(tile_m, _round_up(-(-n // 2), _SUBLANE)))
    d_pad = _round_up(d, _LANE)
    n_pad = _round_up(n, tile_m)
    has_pad = n_pad != n
    if d_pad != d or has_pad:
        contrast = jnp.pad(contrast, ((0, n_pad - n), (0, d_pad - d)))
        g = jnp.pad(g, ((0, n_pad - n), (0, d_pad - d)))

    itemsize = jnp.dtype(contrast.dtype).itemsize
    inv_t = 1.0 / float(temperature)
    grid_m = n_pad // tile_m

    vmem_cap = _vmem_capacity_bytes()
    vmem_limit = min(int(vmem_cap * 0.85), 100 * 1024 * 1024)

    # Resident path if the full contrast matrix plus the [tile_m, n_pad] f32
    # temporaries comfortably fit VMEM (generation-aware budget, 2x headroom
    # below vmem_limit).
    resident_bytes = (2 * n_pad * d_pad * itemsize              # cols (dbl-buf)
                      + 2 * tile_m * d_pad * (itemsize + 4)     # rows + g
                      + 4 * tile_m * n_pad * 4)                 # s/exp/mask tmp
    if resident is None:
        resident = resident_bytes <= vmem_limit // 2

    if resident:
        kernel = functools.partial(
            _simclr_resident_kernel, n_valid=n, n_views=n_views,
            inv_t=inv_t, has_pad=has_pad)
        grid_spec = pltpu.PrefetchScalarGridSpec(
            num_scalar_prefetch=0,
            grid=(grid_m,),
            in_specs=[
                pl.BlockSpec((tile_m, d_pad), lambda i: (i, 0)),   # anchors
                pl.BlockSpec((tile_m, d_pad), lambda i: (i, 0)),   # summed views
                pl.BlockSpec((n_pad, d_pad), lambda i: (0, 0)),    # full contrast
            ],
            out_specs=pl.BlockSpec((tile_m, 1), lambda i: (i, 0)),
        )
        dim_sem = ("parallel",)
        bytes_accessed = (2 * n_pad * d_pad * itemsize
                          + n_pad * d_pad * 4 + n_pad * 4)
    else:
        kernel = functools.partial(
            _simclr_tiled_kernel, n_valid=n, n_views=n_views,
            inv_t=inv_t, has_pad=has_pad)
        grid_spec = pltpu.PrefetchScalarGridSpec(
            num_scalar_prefetch=0,
            grid=(grid_m, grid_m),
            in_specs=[
                pl.BlockSpec((tile_m, d_pad), lambda i, j: (i, 0)),  # anchors
                pl.BlockSpec((tile_m, d_pad), lambda i, j: (i, 0)),  # summed views
                pl.BlockSpec((tile_m, d_pad), lambda i, j: (j, 0)),  # contrasts
            ],
            out_specs=pl.BlockSpec((tile_m, 1), lambda i, j: (i, 0)),
            scratch_shapes=[
                pltpu.VMEM((tile_m, 1), jnp.float32),          # running max
                pltpu.VMEM((tile_m, 1), jnp.float32),          # running denom
                pltpu.VMEM((tile_m, d_pad), contrast.dtype),   # scaled rows
            ],
        )
        dim_sem = ("parallel", "arbitrary")
        bytes_accessed = ((1 + grid_m) * n_pad * d_pad * itemsize
                          + n_pad * d_pad * 4 + n_pad * 4)

    mlpp = pl.pallas_call(
        kernel,
        out_shape=jax.ShapeDtypeStruct((n_pad, 1), jnp.float32),
        grid_spec=grid_spec,
        compiler_params=pltpu.CompilerParams(
            dimension_semantics=dim_sem,
            vmem_limit_bytes=vmem_limit),
        cost_estimate=pl.CostEstimate(
            flops=2 * n_pad * n_pad * d_pad,
            transcendentals=n_pad * n_pad,
            bytes_accessed=bytes_accessed),
    )(contrast, g, contrast)

    mlpp = mlpp[:n, 0]                                  # drop padded anchors
    scale = -(float(temperature) / float(base_temperature))
    return scale * jnp.mean(mlpp)


def simclr_loss_ref(features, temperature=TEMPERATURE,
                    base_temperature=BASE_TEMPERATURE):
    # Pure-JAX reference mirroring the PyTorch forward (default args,
    # view-major ordering, explicit NxN masks).
    bsz, n_views = features.shape[0], features.shape[1]
    feats = features.reshape(bsz, n_views, -1)
    contrast = jnp.transpose(feats, (1, 0, 2)).reshape(bsz * n_views, -1)
    anchor = contrast
    n = bsz * n_views
    adc = (anchor @ contrast.T) / temperature
    logits = adc - jnp.max(adc, axis=1, keepdims=True)
    mask = jnp.tile(jnp.eye(bsz, dtype=jnp.float32), (n_views, n_views))
    logits_mask = 1.0 - jnp.eye(n, dtype=jnp.float32)
    mask = mask * logits_mask
    exp_logits = jnp.exp(logits) * logits_mask
    log_prob = logits - jnp.log(jnp.sum(exp_logits, axis=1, keepdims=True))
    mlpp = jnp.sum(mask * log_prob, axis=1) / jnp.sum(mask, axis=1)
    loss = -(temperature / base_temperature) * mlpp
    return jnp.mean(loss.reshape(n_views, bsz))


if __name__ == "__main__":
    key = jax.random.PRNGKey(0)
    k1, k2 = jax.random.split(key)

    # Case 1: bsz=8, n_views=2, dim=32 (L2-normalized, as typical for SimCLR).
    feats = jax.random.normal(k1, (8, 2, 32), dtype=jnp.float32)
    feats = feats / jnp.linalg.norm(feats, axis=-1, keepdims=True)
    ref = simclr_loss_ref(feats)

    out_res = jax.block_until_ready(
        simclr_loss(feats, compute_dtype=None, resident=True))
    assert jnp.allclose(out_res, ref, rtol=1e-4, atol=1e-4), (out_res, ref)

    out_tiled = jax.block_until_ready(
        simclr_loss(feats, compute_dtype=None, resident=False))
    assert jnp.allclose(out_tiled, ref, rtol=1e-4, atol=1e-4), (out_tiled, ref)

    out_bf16 = jax.block_until_ready(simclr_loss(feats))   # default bf16, auto path
    assert jnp.allclose(out_bf16, ref, rtol=1e-1, atol=1e-1), (out_bf16, ref)

    # Case 2: odd sizes exercising N/D padding and n_views=3 (no alignment).
    feats2 = jax.random.normal(k2, (5, 3, 20), dtype=jnp.float32)
    feats2 = feats2 / jnp.linalg.norm(feats2, axis=-1, keepdims=True)
    ref2 = simclr_loss_ref(feats2)

    out2_res = jax.block_until_ready(
        simclr_loss(feats2, compute_dtype=None, resident=True))
    assert jnp.allclose(out2_res, ref2, rtol=1e-4, atol=1e-4), (out2_res, ref2)

    out2_tiled = jax.block_until_ready(
        simclr_loss(feats2, compute_dtype=None, resident=False))
    assert jnp.allclose(out2_tiled, ref2, rtol=1e-4, atol=1e-4), (out2_tiled, ref2)

    print("KERNEL_OK")
</pallas_src>

<mosaic_0001>
module attributes {stable_mosaic.version = 11 : i64} {
  func.func @_simclr_resident_kernel(%arg0: i32, %arg1: memref<8x128xf32, #tpu.memory_space<vmem>>, %arg2: memref<8x128xf32, #tpu.memory_space<vmem>>, %arg3: memref<16x128xf32, #tpu.memory_space<vmem>>, %arg4: memref<8x1xf32, #tpu.memory_space<vmem>>) attributes {dimension_semantics = [#tpu.dimension_semantics<parallel>], iteration_bounds = array<i64: 2>, scalar_prefetch = 0 : i64, scratch_operands = 0 : i64, tpu.core_type = #tpu.core_type<tc>, window_params = [{transform_indices = @transform_0, window_bounds = array<i64: 8, 128>}, {transform_indices = @transform_1, window_bounds = array<i64: 8, 128>}, {pipeline_mode = #tpu.pipeline_mode<synchronous>, transform_indices = @transform_2, window_bounds = array<i64: 16, 128>}, {transform_indices = @transform_3, window_bounds = array<i64: 8, 1>}]} {
    %c0 = arith.constant 0 : index
    %c0_0 = arith.constant 0 : index
    %0 = vector.load %arg1[%c0, %c0_0] : memref<8x128xf32, #tpu.memory_space<vmem>>, vector<8x128xf32>
    %cst = arith.constant 14.2857141 : f32
    %1 = vector.broadcast %cst : f32 to vector<8x128xf32>
    %2 = arith.mulf %0, %1 : vector<8x128xf32>
    %c0_1 = arith.constant 0 : index
    %c0_2 = arith.constant 0 : index
    %3 = vector.load %arg3[%c0_1, %c0_2] : memref<16x128xf32, #tpu.memory_space<vmem>>, vector<16x128xf32>
    %cst_3 = arith.constant dense<0.000000e+00> : vector<8x16xf32>
    %4 = tpu.matmul %2, %3, %cst_3 {dimension_numbers = #tpu.dot_dimension_numbers<[1], [1], [0], [0], [0, 0, 1, 0], [], []>} : vector<8x128xf32>, vector<16x128xf32>, vector<8x16xf32> -> vector<8x16xf32>
    %cst_4 = arith.constant dense<0xFF800000> : vector<8xf32>
    %5 = vector.multi_reduction <maximumf>, %4, %cst_4 [1] : vector<8x16xf32> to vector<8xf32>
    %6 = vector.shape_cast %5 : vector<8xf32> to vector<8x1xf32>
    %7 = tpu.iota {dimensions = array<i32: 1>} : vector<1x16xi32>
    %c8_i32 = arith.constant 8 : i32
    %8 = arith.muli %arg0, %c8_i32 : i32
    %9 = tpu.iota {dimensions = array<i32: 0>} : vector<8x1xi32>
    %10 = vector.broadcast %8 : i32 to vector<8x1xi32>
    %11 = arith.addi %10, %9 : vector<8x1xi32>
    %12 = vector.broadcast %7 : vector<1x16xi32> to vector<8x16xi32>
    %13 = vector.broadcast %11 : vector<8x1xi32> to vector<8x16xi32>
    %14 = arith.cmpi ne, %12, %13 : vector<8x16xi32>
    %15 = vector.broadcast %6 : vector<8x1xf32> to vector<8x16xf32>
    %16 = arith.subf %4, %15 : vector<8x16xf32>
    %17 = math.exp %16 : vector<8x16xf32>
    %cst_5 = arith.constant 0.000000e+00 : f32
    %18 = vector.broadcast %cst_5 : f32 to vector<8x16xf32>
    %19 = arith.select %14, %17, %18 : vector<8x16xi1>, vector<8x16xf32>
    %cst_6 = arith.constant dense<0.000000e+00> : vector<8xf32>
    %20 = vector.multi_reduction <add>, %19, %cst_6 [1] : vector<8x16xf32> to vector<8xf32>
    %21 = vector.shape_cast %20 : vector<8xf32> to vector<8x1xf32>
    %c0_7 = arith.constant 0 : index
    %c0_8 = arith.constant 0 : index
    %22 = vector.load %arg2[%c0_7, %c0_8] : memref<8x128xf32, #tpu.memory_space<vmem>>, vector<8x128xf32>
    %23 = arith.mulf %0, %22 : vector<8x128xf32>
    %cst_9 = arith.constant dense<0.000000e+00> : vector<8xf32>
    %24 = vector.multi_reduction <add>, %23, %cst_9 [1] : vector<8x128xf32> to vector<8xf32>
    %25 = vector.shape_cast %24 : vector<8xf32> to vector<8x1xf32>
    %cst_10 = arith.constant 14.2857141 : f32
    %26 = vector.broadcast %cst_10 : f32 to vector<8x1xf32>
    %27 = arith.mulf %25, %26 : vector<8x1xf32>
    %28 = arith.mulf %0, %0 : vector<8x128xf32>
    %cst_11 = arith.constant dense<0.000000e+00> : vector<8xf32>
    %29 = vector.multi_reduction <add>, %28, %cst_11 [1] : vector<8x128xf32> to vector<8xf32>
    %30 = vector.shape_cast %29 : vector<8xf32> to vector<8x1xf32>
    %cst_12 = arith.constant 14.2857141 : f32
    %31 = vector.broadcast %cst_12 : f32 to vector<8x1xf32>
    %32 = arith.mulf %30, %31 : vector<8x1xf32>
    %33 = arith.subf %27, %32 : vector<8x1xf32>
    %cst_13 = arith.constant 1.000000e+00 : f32
    %34 = vector.broadcast %cst_13 : f32 to vector<8x1xf32>
    %35 = arith.mulf %33, %34 : vector<8x1xf32>
    %36 = arith.subf %35, %6 : vector<8x1xf32>
    %37 = math.log %21 : vector<8x1xf32>
    %38 = arith.subf %36, %37 : vector<8x1xf32>
    %c0_14 = arith.constant 0 : index
    %c0_15 = arith.constant 0 : index
    %39 = vector.load %arg4[%c0_14, %c0_15] : memref<8x1xf32, #tpu.memory_space<vmem>>, vector<8x1xf32>
    tpu.vector_store %arg4[%c0_14, %c0_15], %38 {strides = array<i32>} : memref<8x1xf32, #tpu.memory_space<vmem>>, vector<8x1xf32>,
    return
  }
  func.func @transform_0(%arg0: i32) -> (i32, i32) {
    %c0_i32 = arith.constant 0 : i32
    %c0_i32_0 = arith.constant 0 : i32
    return %arg0, %c0_i32 : i32, i32
  }
  func.func @transform_1(%arg0: i32) -> (i32, i32) {
    %c0_i32 = arith.constant 0 : i32
    %c0_i32_0 = arith.constant 0 : i32
    return %arg0, %c0_i32 : i32, i32
  }
  func.func @transform_2(%arg0: i32) -> (i32, i32) {
    %c0_i32 = arith.constant 0 : i32
    %c0_i32_0 = arith.constant 0 : i32
    %c0_i32_1 = arith.constant 0 : i32
    return %c0_i32, %c0_i32_0 : i32, i32
  }
  func.func @transform_3(%arg0: i32) -> (i32, i32) {
    %c0_i32 = arith.constant 0 : i32
    %c0_i32_0 = arith.constant 0 : i32
    return %arg0, %c0_i32 : i32, i32
  }
}

</mosaic_0001>

<llo_original>
// kernel: tpu_custom_call.1
$region0: #{tpu_custom_call.1}
  #allocation0 [shape = 'u32[]', space=smem, size = 0x4, offset = 0x4, fixed_abs, tag = 'smem constant byte address 0x4 - core index']
  #allocation1 [shape = 'u32[144,128]{1,0:T(1,128)}', space=vmem, size = 0x12000, scoped, tag = 'internal scratch']
  %s0 = inlined_call_operand.hbm [shape: f32[16,128], index: 0, kind: input, shape index: {}]
  %s1 = inlined_call_operand.hbm [shape: f32[16,128], index: 1, kind: input, shape index: {}]
  %s2 = inlined_call_operand.hbm [shape: f32[16,128], index: 2, kind: input, shape index: {}]
  %s3 = inlined_call_operand.vmem [shape: f32[16,1], index: 3, kind: output, shape index: {}]
  %s4 = sld [smem:[#allocation0]]
  $region57: #{tpu_custom_call.1} parent=0
    _
  %s6 = ssub.s32 1, %s4
  %s7 = scalar_select 0, %s6, %s4
  $region1: #{tpu_custom_call.1} parent=0
    #allocation2 [shape = 'u8[8192]{0}', space=vmem, size = 0x2000, scoped, tag = 'input window, operand 0']
    #allocation3 [shape = 's32[2]{0}', space=sflag, size = 0x8, scoped, tag = 'scoped memory for tpu_custom_call.1']
    #allocation4 [shape = 'u8[8192]{0}', space=vmem, size = 0x2000, scoped, tag = 'input window, operand 1']
    #allocation5 [shape = 's32[2]{0}', space=sflag, size = 0x8, scoped, tag = 'scoped memory for tpu_custom_call.1']
    #allocation6 [shape = 'u8[8192]{0}', space=vmem, size = 0x2000, scoped, tag = 'input window, operand 2, single buffered']
    %8 = vsyncpa [#allocation3], 0
    %s9 = scalar_lea.sflag [#allocation3], 1
    %10 = vsyncpa %s9, 0
    %11 = vsyncpa [#allocation5], 0
    %s12 = scalar_lea.sflag [#allocation5], 1
    %13 = vsyncpa %s12, 0
    loop: start=0, step=1, limit=4
    $region2: #{tpu_custom_call.1} parent=1 // loop_pre_header
      _
    $region3: #{tpu_custom_call.1} parent=1 // loop_header
      %s15 = sphi 0, %s19
      %p16 = scmp.ge.s32.totalorder %s15, 4
      %s25 = sphi 0, %s27
      %s28 = sphi 0, %s25
      %s29 = sphi 0, %s28
      %s45 = sphi 0, %s29
      %s51 = sphi 0, %s53
      %s54 = sphi 0, %s51
      %s55 = sphi 0, %s54
      %s71 = sphi 0, %s55
      %s75 = sphi 0, %s75
      %s77 = sphi 0, %s75
      %s78 = sphi 0, %s77
      %s92 = sphi 0, %s78
      %s98 = sphi 0, %s100
      %s101 = sphi 0, %s98
      %s102 = sphi 0, %s101
      %s118 = sphi 0, %s102
    $region4: #{tpu_custom_call.1} parent=1 // loop_header_branch
      %18 = sbr.rel (%p16) target = $region8
    $region5: #{tpu_custom_call.1} parent=1 // loop_body
      %s20 = ssub.s32 %s15, 1
      %s21 = ssub.s32 %s15, 2
      %s22 = sadd.s32 %s15, 1
      %s23 = ssub.s32 %s15, %s22
      %p24 = scmp.eq.s32.totalorder %s23, 0
      %s26 = sadd.s32 %s25, 1
      %s27 = scalar_select %p24, %s25, %s26
      %p30 = pneg %p24
      %p31 = scmp.eq.s32.totalorder %s15, 1
      %p32 = por %p30, %p31
      %p33 = scmp.ne.s32.totalorder %s25, %s28
      %p34 = scmp.eq.s32.totalorder %s15, 0
      %p35 = por %p33, %p34
      %p36 = scmp.ne.s32.totalorder %s25, %s28
      %p37 = scmp.eq.s32.totalorder %s20, 1
      %p38 = por %p36, %p37
      %p39 = scmp.ne.s32.totalorder %s28, %s29
      %p40 = scmp.eq.s32.totalorder %s20, 0
      %p41 = por %p39, %p40
      %p42 = scmp.ne.s32.totalorder %s28, %s29
      %p43 = scmp.eq.s32.totalorder %s21, 1
      %p44 = por %p42, %p43
      %p46 = scmp.ne.s32.totalorder %s29, %s45
      %p47 = scmp.eq.s32.totalorder %s21, 0
      %p48 = por %p46, %p47
      %s49 = ssub.s32 %s15, %s22
      %p50 = scmp.eq.s32.totalorder %s49, 0
      %s52 = sadd.s32 %s51, 1
      %s53 = scalar_select %p50, %s51, %s52
      %p56 = pneg %p50
      %p57 = scmp.eq.s32.totalorder %s15, 1
      %p58 = por %p56, %p57
      %p59 = scmp.ne.s32.totalorder %s51, %s54
      %p60 = scmp.eq.s32.totalorder %s15, 0
      %p61 = por %p59, %p60
      %p62 = scmp.ne.s32.totalorder %s51, %s54
      %p63 = scmp.eq.s32.totalorder %s20, 1
      %p64 = por %p62, %p63
      %p65 = scmp.ne.s32.totalorder %s54, %s55
      %p66 = scmp.eq.s32.totalorder %s20, 0
      %p67 = por %p65, %p66
      %p68 = scmp.ne.s32.totalorder %s54, %s55
      %p69 = scmp.eq.s32.totalorder %s21, 1
      %p70 = por %p68, %p69
      %p72 = scmp.ne.s32.totalorder %s55, %s71
      %p73 = scmp.eq.s32.totalorder %s21, 0
      %p74 = por %p72, %p73
      %s76 = sadd.s32 %s75, 1
      %p79 = scmp.eq.s32.totalorder %s15, 1
      %p80 = scmp.ne.s32.totalorder %s75, %s77
      %p81 = scmp.eq.s32.totalorder %s15, 0
      %p82 = por %p80, %p81
      %p83 = scmp.ne.s32.totalorder %s75, %s77
      %p84 = scmp.eq.s32.totalorder %s20, 1
      %p85 = por %p83, %p84
      %p86 = scmp.ne.s32.totalorder %s77, %s78
      %p87 = scmp.eq.s32.totalorder %s20, 0
      %p88 = por %p86, %p87
      %p89 = scmp.ne.s32.totalorder %s77, %s78
      %p90 = scmp.eq.s32.totalorder %s21, 1
      %p91 = por %p89, %p90
      %p93 = scmp.ne.s32.totalorder %s78, %s92
      %p94 = scmp.eq.s32.totalorder %s21, 0
      %p95 = por %p93, %p94
      %s96 = ssub.s32 %s15, %s22
      %p97 = scmp.eq.s32.totalorder %s96, 0
      %s99 = sadd.s32 %s98, 1
      %s100 = scalar_select %p97, %s98, %s99
      %p103 = pneg %p97
      %p104 = scmp.eq.s32.totalorder %s15, 1
      %p105 = por %p103, %p104
      %p106 = scmp.ne.s32.totalorder %s98, %s101
      %p107 = scmp.eq.s32.totalorder %s15, 0
      %p108 = por %p106, %p107
      %p109 = scmp.ne.s32.totalorder %s98, %s101
      %p110 = scmp.eq.s32.totalorder %s20, 1
      %p111 = por %p109, %p110
      %p112 = scmp.ne.s32.totalorder %s101, %s102
      %p113 = scmp.eq.s32.totalorder %s20, 0
      %p114 = por %p112, %p113
      %p115 = scmp.ne.s32.totalorder %s101, %s102
      %p116 = scmp.eq.s32.totalorder %s21, 1
      %p117 = por %p115, %p116
      %p119 = scmp.ne.s32.totalorder %s102, %s118
      %p120 = scmp.eq.s32.totalorder %s21, 0
      %p121 = por %p119, %p120
      %p122 = scmp.le.s32.totalorder 1, %s15
      %p123 = scmp.lt.s32.totalorder %s15, 3
      %p124 = pnand %p122, %p123
      %p125 = pneg %p124
      // Predicated region
      $region9: #{tpu_custom_call.1} parent=5 // pred_check
        _
      $region10: #{tpu_custom_call.1} parent=5 // pred_check_branch
        %127 = sbr.rel (%p124) target = $region12
      $region11: #{tpu_custom_call.1} parent=5 // pred_region
        %s128 = ssub.s32 %s15, 1
        // Predicated region
        $region13: #{tpu_custom_call.1} parent=11 // pred_check
          %p129 = pneg %p88
        $region14: #{tpu_custom_call.1} parent=11 // pred_check_branch
          %131 = sbr.rel (%p129) target = $region16
        $region15: #{tpu_custom_call.1} parent=11 // pred_region
          %s133 = ssub.s32 256, 256
          %134 = vsyncadd [#allocation5], %s133
          %s135 = sshll.u32 [#allocation6], 4
          %s136 = int_to_ptr.vmem [resolvable:$true] %s135
          %141 = dma.hbm_to_vmem [thread:$0]  %s2, 256, %s136, [#allocation5], 128, 128, 8
        $region16: #{tpu_custom_call.1} parent=11 // pred_fallthru
          _
      $region12: #{tpu_custom_call.1} parent=5 // pred_fallthru
        _
      %p142 = scmp.lt.s32.totalorder %s15, 2
      // Predicated region
      $region17: #{tpu_custom_call.1} parent=5 // pred_check
        %p143 = pneg %p142
      $region18: #{tpu_custom_call.1} parent=5 // pred_check_branch
        %145 = sbr.rel (%p143) target = $region20
      $region19: #{tpu_custom_call.1} parent=5 // pred_region
        // Predicated region
        $region21: #{tpu_custom_call.1} parent=19 // pred_check
          %p146 = pneg %p35
        $region22: #{tpu_custom_call.1} parent=19 // pred_check_branch
          %148 = sbr.rel (%p146) target = $region24
        $region23: #{tpu_custom_call.1} parent=19 // pred_region
          %s149 = sand.u32 %s25, 1
          %s150 = scalar_lea.sflag [#allocation3], %s149
          %s151 = sand.u32 %s25, 1
          %s152 = smul.addr %s151, 8
          %s153 = scalar_lea.vmem [#allocation2], %s152
          %s155 = ssub.s32 128, 128
          %156 = vsyncadd %s150, %s155
          %s157 = smul.addr %s15, 128
          %s158 = scalar_lea.hbm %s0, %s157
          %s160 = sshll.u32 %s153, 4
          %s161 = int_to_ptr.vmem [resolvable:$true] %s160
          %163 = dma.hbm_to_vmem [thread:$0]  %s158, 128, %s161, %s150
        $region24: #{tpu_custom_call.1} parent=19 // pred_fallthru
          _
        // Predicated region
        $region25: #{tpu_custom_call.1} parent=19 // pred_check
          %p164 = pneg %p61
        $region26: #{tpu_custom_call.1} parent=19 // pred_check_branch
          %166 = sbr.rel (%p164) target = $region28
        $region27: #{tpu_custom_call.1} parent=19 // pred_region
          %s167 = sand.u32 %s15, 1
          %s168 = scalar_lea.sflag [#allocation5], %s167
          %s169 = sand.u32 %s51, 1
          %s170 = smul.addr %s169, 8
          %s171 = scalar_lea.vmem [#allocation4], %s170
          %s173 = ssub.s32 128, 128
          %174 = vsyncadd %s168, %s173
          %s175 = smul.addr %s15, 128
          %s176 = scalar_lea.hbm %s1, %s175
          %s178 = sshll.u32 %s171, 4
          %s179 = int_to_ptr.vmem [resolvable:$true] %s178
          %181 = dma.hbm_to_vmem [thread:$0]  %s176, 128, %s179, %s168
        $region28: #{tpu_custom_call.1} parent=19 // pred_fallthru
          _
      $region20: #{tpu_custom_call.1} parent=5 // pred_fallthru
        _
      %p182 = scmp.le.s32.totalorder 1, %s15
      %p183 = scmp.lt.s32.totalorder %s15, 3
      %p184 = pnand %p182, %p183
      %p185 = pneg %p184
      // Predicated region
      $region29: #{tpu_custom_call.1} parent=5 // pred_check
        _
      $region30: #{tpu_custom_call.1} parent=5 // pred_check_branch
        %187 = sbr.rel (%p184) target = $region32
      $region31: #{tpu_custom_call.1} parent=5 // pred_region
        %s188 = ssub.s32 %s15, 1
        %s189 = sand.u32 %s28, 1
        %s190 = scalar_lea.sflag [#allocation3], %s189
        %s191 = sand.u32 %s28, 1
        %s192 = smul.addr %s191, 8
        %s193 = scalar_lea.vmem [#allocation2], %s192
        // Predicated region
        $region33: #{tpu_custom_call.1} parent=31 // pred_check
          %p194 = pneg %p41
        $region34: #{tpu_custom_call.1} parent=31 // pred_check_branch
          %196 = sbr.rel (%p194) target = $region36
        $region35: #{tpu_custom_call.1} parent=31 // pred_region
          %197 = dma.done %s190, 128
        $region36: #{tpu_custom_call.1} parent=31 // pred_fallthru
          _
        %s198 = sand.u32 %s20, 1
        %s199 = scalar_lea.sflag [#allocation5], %s198
        %s200 = sand.u32 %s54, 1
        %s201 = smul.addr %s200, 8
        %s202 = scalar_lea.vmem [#allocation4], %s201
        // Predicated region
        $region37: #{tpu_custom_call.1} parent=31 // pred_check
          %p203 = pneg %p67
        $region38: #{tpu_custom_call.1} parent=31 // pred_check_branch
          %205 = sbr.rel (%p203) target = $region40
        $region39: #{tpu_custom_call.1} parent=31 // pred_region
          %206 = dma.done %s199, 128
        $region40: #{tpu_custom_call.1} parent=31 // pred_fallthru
          _
        // Predicated region
        $region41: #{tpu_custom_call.1} parent=31 // pred_check
          %p207 = pneg %p88
        $region42: #{tpu_custom_call.1} parent=31 // pred_check_branch
          %209 = sbr.rel (%p207) target = $region44
        $region43: #{tpu_custom_call.1} parent=31 // pred_region
          %210 = dma.done [#allocation5], 256
        $region44: #{tpu_custom_call.1} parent=31 // pred_fallthru
          _
        %s211 = sand.u32 %s28, 1
        %s212 = scalar_lea.sflag [#allocation3], %s211
        %s213 = sand.u32 %s28, 1
        %s214 = smul.addr %s213, 8
        %s215 = scalar_lea.vmem [#allocation2], %s214
        %p216 = pneg %p41
        %p217 = pneg %p38
        %s218 = sand.u32 %s20, 1
        %s219 = scalar_lea.sflag [#allocation5], %s218
        %s220 = sand.u32 %s54, 1
        %s221 = smul.addr %s220, 8
        %s222 = scalar_lea.vmem [#allocation4], %s221
        %p223 = pneg %p67
        %p224 = pneg %p64
        %p225 = pneg %p88
        %p226 = pneg %p85
        %p227 = pneg %p114
        %p228 = pneg %p111
        %p229 = scmp.lt.s32.totalorder %s20, 1
        %s230 = scalar_select %p229, %s20, 1
        %s231 = smul.addr %s230, 8
        %s232 = scalar_lea.vmem %s3, %s231
        %p233 = scmp.lt.s32.totalorder %s20, 1
        %s234 = scalar_select %p233, %s20, 1
        %s235 = smul.addr %s234, 8
        %s236 = scalar_lea.vmem %s3, %s235
        %v237 = vld [vmem:[%s193] sm:$0xff]
        %v238 = vmul.f32 %v237, 14.285714
        %v239 = vld [vmem:[#allocation6] sm:$0xff]
        %v240 = vld [vmem:[#allocation6 + $0x8] sm:$0xff]
        %241 = vmatprep.subr.mxu0 0.0
        %242 = vmatpush1.xpose.msra.mxu0 %v239
        %243 = vmatprep.subr.mxu0 0.0
        %244 = vmatpush1.xpose.msra.mxu0 %v240
        %245 = vmatprep.subr.mxu0 0.0
        %246 = vmatpush1.xpose.msra.mxu0 0.0
        %247 = vmatprep.subr.mxu0 0.0
        %248 = vmatpush1.xpose.msra.mxu0 0.0
        %249 = vmatprep.subr.mxu0 0.0
        %250 = vmatpush1.xpose.msra.mxu0 0.0
        %251 = vmatprep.subr.mxu0 0.0
        %252 = vmatpush1.xpose.msra.mxu0 0.0
        %253 = vmatprep.subr.mxu0 0.0
        %254 = vmatpush1.xpose.msra.mxu0 0.0
        %255 = vmatprep.subr.mxu0 0.0
        %256 = vmatpush1.xpose.msra.mxu0 0.0
        %257 = vmatprep.subr.mxu0 0.0
        %258 = vmatpush1.xpose.msra.mxu0 0.0
        %259 = vmatprep.subr.mxu0 0.0
        %260 = vmatpush1.xpose.msra.mxu0 0.0
        %261 = vmatprep.subr.mxu0 0.0
        %262 = vmatpush1.xpose.msra.mxu0 0.0
        %263 = vmatprep.subr.mxu0 0.0
        %264 = vmatpush1.xpose.msra.mxu0 0.0
        %265 = vmatprep.subr.mxu0 0.0
        %266 = vmatpush1.xpose.msra.mxu0 0.0
        %267 = vmatprep.subr.mxu0 0.0
        %268 = vmatpush1.xpose.msra.mxu0 0.0
        %269 = vmatprep.subr.mxu0 0.0
        %270 = vmatpush1.xpose.msra.mxu0 0.0
        %271 = vmatprep.subr.mxu0 0.0
        %272 = vmatpush1.xpose.msra.mxu0 0.0
        %273 = vmatprep.subr.mxu0 0.0
        %274 = vmatpush1.xpose.msra.mxu0 0.0
        %275 = vmatprep.subr.mxu0 0.0
        %276 = vmatpush1.xpose.msra.mxu0 0.0
        %277 = vmatprep.subr.mxu0 0.0
        %278 = vmatpush1.xpose.msra.mxu0 0.0
        %279 = vmatprep.subr.mxu0 0.0
        %280 = vmatpush1.xpose.msra.mxu0 0.0
        %281 = vmatprep.subr.mxu0 0.0
        %282 = vmatpush1.xpose.msra.mxu0 0.0
        %283 = vmatprep.subr.mxu0 0.0
        %284 = vmatpush1.xpose.msra.mxu0 0.0
        %285 = vmatprep.subr.mxu0 0.0
        %286 = vmatpush1.xpose.msra.mxu0 0.0
        %287 = vmatprep.subr.mxu0 0.0
        %288 = vmatpush1.xpose.msra.mxu0 0.0
        %289 = vmatprep.subr.mxu0 0.0
        %290 = vmatpush1.xpose.msra.mxu0 0.0
        %291 = vmatprep.subr.mxu0 0.0
        %292 = vmatpush1.xpose.msra.mxu0 0.0
        %293 = vmatprep.subr.mxu0 0.0
        %294 = vmatpush1.xpose.msra.mxu0 0.0
        %295 = vmatprep.subr.mxu0 0.0
        %296 = vmatpush1.xpose.msra.mxu0 0.0
        %297 = vmatprep.subr.mxu0 0.0
        %298 = vmatpush1.xpose.msra.mxu0 0.0
        %299 = vmatprep.subr.mxu0 0.0
        %300 = vmatpush1.xpose.msra.mxu0 0.0
        %301 = vmatprep.subr.mxu0 0.0
        %302 = vmatpush1.xpose.msra.mxu0 0.0
        %303 = vmatprep.subr.mxu0 0.0
        %304 = vmatpush1.xpose.msra.mxu0 0.0
        %305 = vmatprep.mubr.f32.mxu0 0.0
        %306 = vmatmul.mubr.f32.gmra.mrb[0].mxu0 %v238
        %v307 = vpop.f32.mrb[0].mxu0
        %v308 = vadd.f32 0.0, %v307
        %v309 = vpop.f32.mrb[0].mxu0
        %310 = vdwg.mxu0
        %vm311 = vcmask 130048
        %v312 = vsel %vm311, %v308, -inf
        %313 = vmax.xlane.f32.xlu0 %v312
        %v314 = vpop.xlane.xlu0 %313
        %v315 = vlaneseq
        %v316 = vand.u32 %v315, 127
        %s317 = smul.u32 %s20, 8
        %v318 = vlaneseq
        %v319 = vshrl.u32 %v318, 7
        %v320 = vstv %s317
        %v321 = vadd.s32 %v320, %v319
        %vm322 = vcmp.ne.s32.totalorder %v316, %v321
        %v323 = vsub.f32 %v308, %v314
        %v324 = vmul.f32 %v323, 1.442695
        %v325 = vpow.pop %v324
        %v326 = vsel %vm322, %v325, 0.0
        %v327 = vsel %vm311, %v326, 0.0
        %328 = vadd.xlane.f32.xlu0 %v327
        %v329 = vpop.xlane.xlu0 %328
        %v330 = vld [vmem:[%s202] sm:$0xff]
        %v331 = vmul.f32 %v237, %v330
        %332 = vadd.xlane.f32.xlu0 %v331
        %v333 = vpop.xlane.xlu0 %332
        %v334 = vmul.f32 %v333, 14.285714
        %v335 = vmul.f32 %v237, %v237
        %336 = vadd.xlane.f32.xlu0 %v335
        %v337 = vpop.xlane.xlu0 %336
        %v338 = vmul.f32 %v337, 14.285714
        %v339 = vsub.f32 %v334, %v338
        %v340 = vsub.f32 %v339, %v314
        %v341 = vlog2.pop %v329
        %v342 = vmul.f32 %v341, 0.6931472
        %v343 = vsub.f32 %v340, %v342
        %vm344 = vcmask 7168
        %345 = vst.msk [vmem:[%s236] sm:$0xff] %vm344, %v343
        %p346 = scmp.lt.s32.totalorder %s20, 1
        %s347 = scalar_select %p346, %s20, 1
        %s348 = smul.addr %s347, 8
        %s349 = scalar_lea.vmem %s3, %s348
        // Predicated region
        $region45: #{tpu_custom_call.1} parent=31 // pred_check
          %p350 = pneg %p111
        $region46: #{tpu_custom_call.1} parent=31 // pred_check_branch
          %352 = sbr.rel (%p350) target = $region48
        $region47: #{tpu_custom_call.1} parent=31 // pred_region
          _
        $region48: #{tpu_custom_call.1} parent=31 // pred_fallthru
          _
      $region32: #{tpu_custom_call.1} parent=5 // pred_fallthru
        _
      %p353 = scmp.le.s32.totalorder 2, %s15
      // Predicated region
      $region49: #{tpu_custom_call.1} parent=5 // pred_check
        %p354 = pneg %p353
      $region50: #{tpu_custom_call.1} parent=5 // pred_check_branch
        %356 = sbr.rel (%p354) target = $region52
      $region51: #{tpu_custom_call.1} parent=5 // pred_region
        %s357 = ssub.s32 %s15, 2
        // Predicated region
        $region53: #{tpu_custom_call.1} parent=51 // pred_check
          %p358 = pneg %p117
        $region54: #{tpu_custom_call.1} parent=51 // pred_check_branch
          %360 = sbr.rel (%p358) target = $region56
        $region55: #{tpu_custom_call.1} parent=51 // pred_region
          %p361 = scmp.lt.s32.totalorder %s21, 1
          %s362 = scalar_select %p361, %s21, 1
          %s363 = smul.addr %s362, 8
          %s364 = scalar_lea.vmem %s3, %s363
        $region56: #{tpu_custom_call.1} parent=51 // pred_fallthru
          _
      $region52: #{tpu_custom_call.1} parent=5 // pred_fallthru
        _
    $region6: #{tpu_custom_call.1} parent=1 // loop_footer
      %s19 = sadd.s32 1, %s15
    $region7: #{tpu_custom_call.1} parent=1 // loop_footer_branch
      %14 = sbr.rel target = $region3
    $region8: #{tpu_custom_call.1} parent=1 // loop_exit
      _
    %365 = vsyncpa [#allocation3], 1
    %s366 = scalar_lea.sflag [#allocation3], 1
    %367 = vsyncpa %s366, 1
    %368 = vsyncpa [#allocation5], 1
    %s369 = scalar_lea.sflag [#allocation5], 1
    %370 = vsyncpa %s369, 1

</llo_original>
